<compile_context>
chip_gen: v5e
topology: v5e:2x2
jax: 0.10.0
libtpu: 0.0.40
codegen_flags: <defaults>
</compile_context>

<pallas_src>
import jax
import jax.numpy as jnp
from jax.experimental import pallas as pl
from jax.experimental.pallas import tpu as pltpu


# ---------------------------------------------------------------------------
# helpers
# ---------------------------------------------------------------------------
def _round_up(x, m):
    return ((x + m - 1) // m) * m


def _pick_time_tile(T, cap):
    """Largest divisor of T <= cap; if that is degenerate (<8), stretch up to
    the smallest divisor >= cap (avoids tt=1 pipelines for prime/odd T)."""
    divs = [d for d in range(1, T + 1) if T % d == 0]
    best = max(d for d in divs if d <= cap)
    if best >= min(8, T):
        return best
    return min(d for d in divs if d >= cap)


def _pick_stage1_tile(T, cap):
    """Largest multiple-of-8 divisor of T <= cap (BlockSpec sublane rule for
    the (B, tt1, D) input block); otherwise the full T (always legal)."""
    cands = [d for d in range(8, min(cap, T) + 1, 8) if T % d == 0]
    return max(cands) if cands else T


def _vmem_limit(estimate_bytes):
    """Only raise the scoped-VMEM limit when the default would be tight."""
    need = 2 * estimate_bytes
    if need <= 32 * 2**20:
        return None
    return int(min(need, 96 * 2**20))


# ---------------------------------------------------------------------------
# Stage 1: hoisted input projection, written time-major directly
# ---------------------------------------------------------------------------
def _input_proj_kernel(x_ref, wih_ref, b_ref, xw_ref):
    # x_ref:   (B, tt1, D)  f32   natural batch-major input slab
    # wih_ref: (D, G)       bf16  gate-padded W_ih^T            (loop invariant)
    # b_ref:   (1, G)       f32   gate-padded (b_ih + b_hh)     (loop invariant)
    # xw_ref:  (tt1, B, G)  bf16  time-major pre-activations
    tt1 = x_ref.shape[1]
    w = wih_ref[...]
    bias = b_ref[...]
    for t in range(tt1):  # static unroll; writes hit the leading dim (cheap)
        xt = x_ref[:, t, :].astype(jnp.bfloat16)                      # (B, D)
        y = jnp.dot(xt, w, preferred_element_type=jnp.float32) + bias
        xw_ref[t] = y.astype(xw_ref.dtype)


# ---------------------------------------------------------------------------
# Stage 2: serial LSTM recurrence over time + fused final Linear
# ---------------------------------------------------------------------------
def _lstm_recurrent_kernel(xw_ref, whh_ref, w1_ref, b1_ref, y_ref, h_sc, c_sc):
    # xw_ref:  (tt, tb, G)    bf16  pre-activations for this (batch,time) slab
    # whh_ref: (Hp, G)        bf16  gate-padded W_hh^T         (loop invariant)
    # w1_ref:  (Hp, out_pad)  bf16  final Linear weight        (loop invariant)
    # b1_ref:  (1, out_pad)   f32
    # y_ref:   (tb, out_pad)  f32   lane-dense padded output slab
    # h_sc/c_sc: (tb, Hp)     f32   recurrent state carried across time blocks
    t_blk = pl.program_id(1)
    n_t_blk = pl.num_programs(1)
    TT = xw_ref.shape[0]
    Hp = h_sc.shape[1]

    # Skip the zero-store + immediate reload on the first time block: select
    # zeros as the loop init (stale scratch values are discarded by the select).
    first = t_blk == 0
    h0 = jnp.where(first, 0.0, h_sc[...])
    c0 = jnp.where(first, 0.0, c_sc[...])

    whh = whh_ref[...]

    def step(i, carry):
        h, c = carry
        # Only the recurrent matmul stays on the serial critical path.
        # bf16 MXU operands, f32 accumulation; xw (bf16) promotes to f32.
        gates = xw_ref[i] + jnp.dot(
            h.astype(jnp.bfloat16), whh, preferred_element_type=jnp.float32)
        # PyTorch gate order: input, forget, cell(g), output.  Gate bands are
        # padded to Hp (multiple of 128) so these slices are lane-aligned.
        i_g = jax.nn.sigmoid(gates[:, 0 * Hp:1 * Hp])
        f_g = jax.nn.sigmoid(gates[:, 1 * Hp:2 * Hp])
        g_g = jnp.tanh(gates[:, 2 * Hp:3 * Hp])
        o_g = jax.nn.sigmoid(gates[:, 3 * Hp:4 * Hp])
        c_new = f_g * c + i_g * g_g
        h_new = o_g * jnp.tanh(c_new)
        return h_new, c_new

    h, c = jax.lax.fori_loop(0, TT, step, (h0, c0), unroll=True)
    h_sc[...] = h
    c_sc[...] = c

    @pl.when(t_blk == n_t_blk - 1)
    def _():
        # TODO(synk): nn.Dropout(p=0.2) is identity in eval mode; training-mode
        # stochastic dropout intentionally not reproduced.
        y = jnp.dot(h.astype(jnp.bfloat16), w1_ref[...],
                    preferred_element_type=jnp.float32) + b1_ref[...]
        y_ref[...] = y.astype(y_ref.dtype)


# ---------------------------------------------------------------------------
# parameter packing: 128-lane-aligned gate bands + bf16 matmul weights
# ---------------------------------------------------------------------------
def _pack_params(params):
    w_ih_t = params["w_ih_t"]    # (D, 4H) f32
    w_hh_t = params["w_hh_t"]    # (H, 4H) f32
    b = params["b"]              # (1, 4H) f32  (b_ih + b_hh)
    w1_t = params["w1_t"]        # (H, out) f32
    b1 = params["b1"]            # (1, out) f32
    D = w_ih_t.shape[0]
    H = w_hh_t.shape[0]
    out = w1_t.shape[1]
    Hp = _round_up(H, 128)
    G = 4 * Hp
    out_pad = _round_up(out, 128)

    wih_p = jnp.zeros((D, G), jnp.float32)
    whh_p = jnp.zeros((Hp, G), jnp.float32)
    b_p = jnp.zeros((1, G), jnp.float32)
    for g in range(4):
        wih_p = wih_p.at[:, g * Hp:g * Hp + H].set(w_ih_t[:, g * H:(g + 1) * H])
        whh_p = whh_p.at[:H, g * Hp:g * Hp + H].set(w_hh_t[:, g * H:(g + 1) * H])
        b_p = b_p.at[:, g * Hp:g * Hp + H].set(b[:, g * H:(g + 1) * H])
    # Zero-padded gate columns keep padded h/c lanes exactly 0 for all t:
    #   preact_pad = 0 -> i=f=o=0.5, g=0 -> c_pad stays 0, h_pad stays 0.
    w1_p = jnp.zeros((Hp, out_pad), jnp.float32).at[:H, :out].set(w1_t)
    b1_p = jnp.zeros((1, out_pad), jnp.float32).at[:, :out].set(b1)
    return dict(
        wih=wih_p.astype(jnp.bfloat16), whh=whh_p.astype(jnp.bfloat16),
        w1=w1_p.astype(jnp.bfloat16), b=b_p, b1=b1_p,
        Hp=Hp, G=G, out=out, out_pad=out_pad)


# ---------------------------------------------------------------------------
# forward
# ---------------------------------------------------------------------------
def _forward_impl(x, packed, tt, tb, tt1, xw_buffers, use_buffered):
    B, T, D = x.shape
    Hp, G = packed["Hp"], packed["G"]
    out, out_pad = packed["out"], packed["out_pad"]

    def spec(shape, imap, nbuf=None):
        if use_buffered and nbuf is not None:
            return pl.BlockSpec(shape, imap, pipeline_mode=pl.Buffered(nbuf))
        return pl.BlockSpec(shape, imap)

    # ---- Stage 1: input projection, time-major (T, B, G) bf16 output -------
    tt1 = _pick_stage1_tile(T, tt1)
    nt1 = T // tt1
    est1 = (B * tt1 * D * 4 + tt1 * B * G * 2) * 2 + (D * G * 2 + G * 4) * 2
    xw = pl.pallas_call(
        _input_proj_kernel,
        out_shape=jax.ShapeDtypeStruct((T, B, G), jnp.bfloat16),
        grid_spec=pltpu.PrefetchScalarGridSpec(
            num_scalar_prefetch=0,
            grid=(nt1,),
            in_specs=[
                spec((B, tt1, D), lambda ti: (0, ti, 0)),   # x time slab
                spec((D, G), lambda ti: (0, 0)),            # W_ih^T (invariant)
                spec((1, G), lambda ti: (0, 0)),            # bias   (invariant)
            ],
            out_specs=pl.BlockSpec((tt1, B, G), lambda ti: (ti, 0, 0)),
        ),
        compiler_params=pltpu.CompilerParams(
            dimension_semantics=("parallel",),
            vmem_limit_bytes=_vmem_limit(est1)),
    )(x, packed["wih"], packed["b"])

    # ---- Stage 2: serial recurrence, tt timesteps per grid step ------------
    if tb is None:
        # v7x megacore: shard the batch across the two TensorCores when each
        # half stays 16-sublane aligned (bf16 xw block constraint).
        tb = B // 2 if (B % 2 == 0 and (B // 2) % 16 == 0) else B
    if B % tb or (tb != B and tb % 16):
        tb = B
    tt = _pick_time_tile(T, tt)
    nb, nt = B // tb, T // tt

    def est2(nbuf):
        return (tt * tb * G * 2 * nbuf                       # streaming xw slabs
                + (Hp * G * 2 + Hp * out_pad * 2 + out_pad * 4) * 2  # weights
                + tb * out_pad * 4 * 2                       # output slab x2
                + 2 * tb * Hp * 4)                           # h/c scratch
    n_xw_buf = xw_buffers
    if n_xw_buf > 2 and est2(n_xw_buf) > 48 * 2**20:
        n_xw_buf = 2                                         # v7x 64 MiB budget

    y_pad = pl.pallas_call(
        _lstm_recurrent_kernel,
        out_shape=jax.ShapeDtypeStruct((B, out_pad), jnp.float32),
        grid_spec=pltpu.PrefetchScalarGridSpec(
            num_scalar_prefetch=0,
            grid=(nb, nt),
            in_specs=[
                spec((tt, tb, G), lambda bi, ti: (ti, bi, 0), n_xw_buf),  # xw
                spec((Hp, G), lambda bi, ti: (0, 0)),             # W_hh^T
                spec((Hp, out_pad), lambda bi, ti: (0, 0)),       # W1^T (padded)
                spec((1, out_pad), lambda bi, ti: (0, 0)),        # b1   (padded)
            ],
            out_specs=pl.BlockSpec((tb, out_pad), lambda bi, ti: (bi, 0)),
            scratch_shapes=[
                pltpu.VMEM((tb, Hp), jnp.float32),   # h state
                pltpu.VMEM((tb, Hp), jnp.float32),   # c state
            ],
        ),
        compiler_params=pltpu.CompilerParams(
            dimension_semantics=("parallel", "arbitrary"),
            vmem_limit_bytes=_vmem_limit(est2(n_xw_buf))),
    )(xw, packed["whh"], packed["w1"], packed["b1"])
    return y_pad[:, :out]


def text_subnet_forward(x, params, *, tt=16, tb=None, tt1=16, xw_buffers=2):
    """x: (B, T, in_size) float32  ->  (B, out_size) float32."""
    assert x.ndim == 3 and x.shape[1] >= 1, "expect (B, T, in_size) with T >= 1"
    packed = _pack_params(params)
    try:
        return _forward_impl(x, packed, tt, tb, tt1, xw_buffers,
                             use_buffered=True)
    except (TypeError, AttributeError):
        # Only for jax versions without BlockSpec(pipeline_mode=pl.Buffered).
        return _forward_impl(x, packed, tt, tb, tt1, xw_buffers,
                             use_buffered=False)


# ---------------------------------------------------------------------------
# pure-JAX reference + params
# ---------------------------------------------------------------------------
def _reference_forward(x, params):
    """Pure-JAX f32 reference (lax.scan LSTM) for correctness checking."""
    w_ih_t, w_hh_t, b = params["w_ih_t"], params["w_hh_t"], params["b"]
    w1_t, b1 = params["w1_t"], params["b1"]
    H = w_hh_t.shape[0]
    B = x.shape[0]

    def step(carry, x_t):
        h, c = carry
        gates = x_t @ w_ih_t + h @ w_hh_t + b
        i = jax.nn.sigmoid(gates[:, :H])
        f = jax.nn.sigmoid(gates[:, H:2 * H])
        g = jnp.tanh(gates[:, 2 * H:3 * H])
        o = jax.nn.sigmoid(gates[:, 3 * H:4 * H])
        c = f * c + i * g
        h = o * jnp.tanh(c)
        return (h, c), None

    h0 = jnp.zeros((B, H), jnp.float32)
    c0 = jnp.zeros((B, H), jnp.float32)
    (h_n, _), _ = jax.lax.scan(step, (h0, c0), jnp.transpose(x, (1, 0, 2)))
    return h_n @ w1_t + b1


def make_params(key, in_size, hidden_size, out_size):
    k1, k2, k3, k4, k5, k6 = jax.random.split(key, 6)
    s = 0.1
    w_ih = jax.random.normal(k1, (4 * hidden_size, in_size), jnp.float32) * s
    w_hh = jax.random.normal(k2, (4 * hidden_size, hidden_size), jnp.float32) * s
    b_ih = jax.random.normal(k3, (4 * hidden_size,), jnp.float32) * s
    b_hh = jax.random.normal(k4, (4 * hidden_size,), jnp.float32) * s
    w1 = jax.random.normal(k5, (out_size, hidden_size), jnp.float32) * s
    b1 = jax.random.normal(k6, (out_size,), jnp.float32) * s
    return {
        "w_ih_t": w_ih.T,                        # (in, 4H)
        "w_hh_t": w_hh.T,                        # (H, 4H)
        "b": (b_ih + b_hh)[None, :],             # (1, 4H)
        "w1_t": w1.T,                            # (H, out)
        "b1": b1[None, :],                       # (1, out)
    }


if __name__ == "__main__":
    B, T, IN, HID, OUT = 2, 8, 16, 32, 8
    key = jax.random.PRNGKey(0)
    kx, kp = jax.random.split(key)
    x = jax.random.normal(kx, (B, T, IN), jnp.float32)
    params = make_params(kp, IN, HID, OUT)

    y = text_subnet_forward(x, params)
    y = jax.block_until_ready(y)

    y_ref = _reference_forward(x, params)
    assert y.shape == (B, OUT)
    # bf16 MXU operands with f32 accumulation -> relax tolerance vs f32 ref.
    assert jnp.allclose(y, y_ref, atol=3e-2, rtol=3e-2), "mismatch vs reference"
    print("KERNEL_OK")
</pallas_src>

<mosaic_0001>
module attributes {stable_mosaic.version = 11 : i64} {
  func.func @_input_proj_kernel(%arg0: i32, %arg1: memref<2x8x16xf32, #tpu.memory_space<vmem>>, %arg2: memref<16x512xbf16, #tpu.memory_space<vmem>>, %arg3: memref<1x512xf32, #tpu.memory_space<vmem>>, %arg4: memref<8x2x512xbf16, #tpu.memory_space<vmem>>) attributes {dimension_semantics = [#tpu.dimension_semantics<parallel>], iteration_bounds = array<i64: 1>, scalar_prefetch = 0 : i64, scratch_operands = 0 : i64, tpu.core_type = #tpu.core_type<tc>, window_params = [{transform_indices = @transform_0, window_bounds = array<i64: 2, 8, 16>}, {pipeline_mode = #tpu.pipeline_mode<synchronous>, transform_indices = @transform_1, window_bounds = array<i64: 16, 512>}, {pipeline_mode = #tpu.pipeline_mode<synchronous>, transform_indices = @transform_2, window_bounds = array<i64: 1, 512>}, {transform_indices = @transform_3, window_bounds = array<i64: 8, 2, 512>}]} {
    %c0 = arith.constant 0 : index
    %c0_0 = arith.constant 0 : index
    %0 = vector.load %arg2[%c0, %c0_0] : memref<16x512xbf16, #tpu.memory_space<vmem>>, vector<16x512xbf16>
    %c0_1 = arith.constant 0 : index
    %c0_2 = arith.constant 0 : index
    %1 = vector.load %arg3[%c0_1, %c0_2] : memref<1x512xf32, #tpu.memory_space<vmem>>, vector<1x512xf32>
    %c0_3 = arith.constant 0 : index
    %c0_4 = arith.constant 0 : index
    %c0_5 = arith.constant 0 : index
    %2 = vector.load %arg1[%c0_3, %c0_4, %c0_5] : memref<2x8x16xf32, #tpu.memory_space<vmem>>, vector<2x1x16xf32>
    %3 = vector.shape_cast %2 : vector<2x1x16xf32> to vector<2x16xf32>
    %4 = arith.truncf %3 : vector<2x16xf32> to vector<2x16xbf16>
    %cst = arith.constant dense<0.000000e+00> : vector<2x512xf32>
    %5 = tpu.matmul %4, %0, %cst {dimension_numbers = #tpu.dot_dimension_numbers<[1], [0], [0], [1], [0, 0, 1, 1], [], []>} : vector<2x16xbf16>, vector<16x512xbf16>, vector<2x512xf32> -> vector<2x512xf32>
    %6 = vector.broadcast %1 : vector<1x512xf32> to vector<2x512xf32>
    %7 = arith.addf %5, %6 : vector<2x512xf32>
    %8 = arith.truncf %7 : vector<2x512xf32> to vector<2x512xbf16>
    %c0_6 = arith.constant 0 : index
    %c0_7 = arith.constant 0 : index
    %c0_8 = arith.constant 0 : index
    %9 = vector.load %arg4[%c0_6, %c0_7, %c0_8] : memref<8x2x512xbf16, #tpu.memory_space<vmem>>, vector<1x2x512xbf16>
    %10 = vector.shape_cast %9 : vector<1x2x512xbf16> to vector<2x512xbf16>
    %11 = vector.shape_cast %8 : vector<2x512xbf16> to vector<1x2x512xbf16>
    tpu.vector_store %arg4[%c0_6, %c0_7, %c0_8], %11 {strides = array<i32>} : memref<8x2x512xbf16, #tpu.memory_space<vmem>>, vector<1x2x512xbf16>,
    %c0_9 = arith.constant 0 : index
    %c1 = arith.constant 1 : index
    %c0_10 = arith.constant 0 : index
    %12 = vector.load %arg1[%c0_9, %c1, %c0_10] : memref<2x8x16xf32, #tpu.memory_space<vmem>>, vector<2x1x16xf32>
    %13 = vector.shape_cast %12 : vector<2x1x16xf32> to vector<2x16xf32>
    %14 = arith.truncf %13 : vector<2x16xf32> to vector<2x16xbf16>
    %cst_11 = arith.constant dense<0.000000e+00> : vector<2x512xf32>
    %15 = tpu.matmul %14, %0, %cst_11 {dimension_numbers = #tpu.dot_dimension_numbers<[1], [0], [0], [1], [0, 0, 1, 1], [], []>} : vector<2x16xbf16>, vector<16x512xbf16>, vector<2x512xf32> -> vector<2x512xf32>
    %16 = vector.broadcast %1 : vector<1x512xf32> to vector<2x512xf32>
    %17 = arith.addf %15, %16 : vector<2x512xf32>
    %18 = arith.truncf %17 : vector<2x512xf32> to vector<2x512xbf16>
    %c1_12 = arith.constant 1 : index
    %c0_13 = arith.constant 0 : index
    %c0_14 = arith.constant 0 : index
    %19 = vector.load %arg4[%c1_12, %c0_13, %c0_14] : memref<8x2x512xbf16, #tpu.memory_space<vmem>>, vector<1x2x512xbf16>
    %20 = vector.shape_cast %19 : vector<1x2x512xbf16> to vector<2x512xbf16>
    %21 = vector.shape_cast %18 : vector<2x512xbf16> to vector<1x2x512xbf16>
    tpu.vector_store %arg4[%c1_12, %c0_13, %c0_14], %21 {strides = array<i32>} : memref<8x2x512xbf16, #tpu.memory_space<vmem>>, vector<1x2x512xbf16>,
    %c0_15 = arith.constant 0 : index
    %c2 = arith.constant 2 : index
    %c0_16 = arith.constant 0 : index
    %22 = vector.load %arg1[%c0_15, %c2, %c0_16] : memref<2x8x16xf32, #tpu.memory_space<vmem>>, vector<2x1x16xf32>
    %23 = vector.shape_cast %22 : vector<2x1x16xf32> to vector<2x16xf32>
    %24 = arith.truncf %23 : vector<2x16xf32> to vector<2x16xbf16>
    %cst_17 = arith.constant dense<0.000000e+00> : vector<2x512xf32>
    %25 = tpu.matmul %24, %0, %cst_17 {dimension_numbers = #tpu.dot_dimension_numbers<[1], [0], [0], [1], [0, 0, 1, 1], [], []>} : vector<2x16xbf16>, vector<16x512xbf16>, vector<2x512xf32> -> vector<2x512xf32>
    %26 = vector.broadcast %1 : vector<1x512xf32> to vector<2x512xf32>
    %27 = arith.addf %25, %26 : vector<2x512xf32>
    %28 = arith.truncf %27 : vector<2x512xf32> to vector<2x512xbf16>
    %c2_18 = arith.constant 2 : index
    %c0_19 = arith.constant 0 : index
    %c0_20 = arith.constant 0 : index
    %29 = vector.load %arg4[%c2_18, %c0_19, %c0_20] : memref<8x2x512xbf16, #tpu.memory_space<vmem>>, vector<1x2x512xbf16>
    %30 = vector.shape_cast %29 : vector<1x2x512xbf16> to vector<2x512xbf16>
    %31 = vector.shape_cast %28 : vector<2x512xbf16> to vector<1x2x512xbf16>
    tpu.vector_store %arg4[%c2_18, %c0_19, %c0_20], %31 {strides = array<i32>} : memref<8x2x512xbf16, #tpu.memory_space<vmem>>, vector<1x2x512xbf16>,
    %c0_21 = arith.constant 0 : index
    %c3 = arith.constant 3 : index
    %c0_22 = arith.constant 0 : index
    %32 = vector.load %arg1[%c0_21, %c3, %c0_22] : memref<2x8x16xf32, #tpu.memory_space<vmem>>, vector<2x1x16xf32>
    %33 = vector.shape_cast %32 : vector<2x1x16xf32> to vector<2x16xf32>
    %34 = arith.truncf %33 : vector<2x16xf32> to vector<2x16xbf16>
    %cst_23 = arith.constant dense<0.000000e+00> : vector<2x512xf32>
    %35 = tpu.matmul %34, %0, %cst_23 {dimension_numbers = #tpu.dot_dimension_numbers<[1], [0], [0], [1], [0, 0, 1, 1], [], []>} : vector<2x16xbf16>, vector<16x512xbf16>, vector<2x512xf32> -> vector<2x512xf32>
    %36 = vector.broadcast %1 : vector<1x512xf32> to vector<2x512xf32>
    %37 = arith.addf %35, %36 : vector<2x512xf32>
    %38 = arith.truncf %37 : vector<2x512xf32> to vector<2x512xbf16>
    %c3_24 = arith.constant 3 : index
    %c0_25 = arith.constant 0 : index
    %c0_26 = arith.constant 0 : index
    %39 = vector.load %arg4[%c3_24, %c0_25, %c0_26] : memref<8x2x512xbf16, #tpu.memory_space<vmem>>, vector<1x2x512xbf16>
    %40 = vector.shape_cast %39 : vector<1x2x512xbf16> to vector<2x512xbf16>
    %41 = vector.shape_cast %38 : vector<2x512xbf16> to vector<1x2x512xbf16>
    tpu.vector_store %arg4[%c3_24, %c0_25, %c0_26], %41 {strides = array<i32>} : memref<8x2x512xbf16, #tpu.memory_space<vmem>>, vector<1x2x512xbf16>,
    %c0_27 = arith.constant 0 : index
    %c4 = arith.constant 4 : index
    %c0_28 = arith.constant 0 : index
    %42 = vector.load %arg1[%c0_27, %c4, %c0_28] : memref<2x8x16xf32, #tpu.memory_space<vmem>>, vector<2x1x16xf32>
    %43 = vector.shape_cast %42 : vector<2x1x16xf32> to vector<2x16xf32>
    %44 = arith.truncf %43 : vector<2x16xf32> to vector<2x16xbf16>
    %cst_29 = arith.constant dense<0.000000e+00> : vector<2x512xf32>
    %45 = tpu.matmul %44, %0, %cst_29 {dimension_numbers = #tpu.dot_dimension_numbers<[1], [0], [0], [1], [0, 0, 1, 1], [], []>} : vector<2x16xbf16>, vector<16x512xbf16>, vector<2x512xf32> -> vector<2x512xf32>
    %46 = vector.broadcast %1 : vector<1x512xf32> to vector<2x512xf32>
    %47 = arith.addf %45, %46 : vector<2x512xf32>
    %48 = arith.truncf %47 : vector<2x512xf32> to vector<2x512xbf16>
    %c4_30 = arith.constant 4 : index
    %c0_31 = arith.constant 0 : index
    %c0_32 = arith.constant 0 : index
    %49 = vector.load %arg4[%c4_30, %c0_31, %c0_32] : memref<8x2x512xbf16, #tpu.memory_space<vmem>>, vector<1x2x512xbf16>
    %50 = vector.shape_cast %49 : vector<1x2x512xbf16> to vector<2x512xbf16>
    %51 = vector.shape_cast %48 : vector<2x512xbf16> to vector<1x2x512xbf16>
    tpu.vector_store %arg4[%c4_30, %c0_31, %c0_32], %51 {strides = array<i32>} : memref<8x2x512xbf16, #tpu.memory_space<vmem>>, vector<1x2x512xbf16>,
    %c0_33 = arith.constant 0 : index
    %c5 = arith.constant 5 : index
    %c0_34 = arith.constant 0 : index
    %52 = vector.load %arg1[%c0_33, %c5, %c0_34] : memref<2x8x16xf32, #tpu.memory_space<vmem>>, vector<2x1x16xf32>
    %53 = vector.shape_cast %52 : vector<2x1x16xf32> to vector<2x16xf32>
    %54 = arith.truncf %53 : vector<2x16xf32> to vector<2x16xbf16>
    %cst_35 = arith.constant dense<0.000000e+00> : vector<2x512xf32>
    %55 = tpu.matmul %54, %0, %cst_35 {dimension_numbers = #tpu.dot_dimension_numbers<[1], [0], [0], [1], [0, 0, 1, 1], [], []>} : vector<2x16xbf16>, vector<16x512xbf16>, vector<2x512xf32> -> vector<2x512xf32>
    %56 = vector.broadcast %1 : vector<1x512xf32> to vector<2x512xf32>
    %57 = arith.addf %55, %56 : vector<2x512xf32>
    %58 = arith.truncf %57 : vector<2x512xf32> to vector<2x512xbf16>
    %c5_36 = arith.constant 5 : index
    %c0_37 = arith.constant 0 : index
    %c0_38 = arith.constant 0 : index
    %59 = vector.load %arg4[%c5_36, %c0_37, %c0_38] : memref<8x2x512xbf16, #tpu.memory_space<vmem>>, vector<1x2x512xbf16>
    %60 = vector.shape_cast %59 : vector<1x2x512xbf16> to vector<2x512xbf16>
    %61 = vector.shape_cast %58 : vector<2x512xbf16> to vector<1x2x512xbf16>
    tpu.vector_store %arg4[%c5_36, %c0_37, %c0_38], %61 {strides = array<i32>} : memref<8x2x512xbf16, #tpu.memory_space<vmem>>, vector<1x2x512xbf16>,
    %c0_39 = arith.constant 0 : index
    %c6 = arith.constant 6 : index
    %c0_40 = arith.constant 0 : index
    %62 = vector.load %arg1[%c0_39, %c6, %c0_40] : memref<2x8x16xf32, #tpu.memory_space<vmem>>, vector<2x1x16xf32>
    %63 = vector.shape_cast %62 : vector<2x1x16xf32> to vector<2x16xf32>
    %64 = arith.truncf %63 : vector<2x16xf32> to vector<2x16xbf16>
    %cst_41 = arith.constant dense<0.000000e+00> : vector<2x512xf32>
    %65 = tpu.matmul %64, %0, %cst_41 {dimension_numbers = #tpu.dot_dimension_numbers<[1], [0], [0], [1], [0, 0, 1, 1], [], []>} : vector<2x16xbf16>, vector<16x512xbf16>, vector<2x512xf32> -> vector<2x512xf32>
    %66 = vector.broadcast %1 : vector<1x512xf32> to vector<2x512xf32>
    %67 = arith.addf %65, %66 : vector<2x512xf32>
    %68 = arith.truncf %67 : vector<2x512xf32> to vector<2x512xbf16>
    %c6_42 = arith.constant 6 : index
    %c0_43 = arith.constant 0 : index
    %c0_44 = arith.constant 0 : index
    %69 = vector.load %arg4[%c6_42, %c0_43, %c0_44] : memref<8x2x512xbf16, #tpu.memory_space<vmem>>, vector<1x2x512xbf16>
    %70 = vector.shape_cast %69 : vector<1x2x512xbf16> to vector<2x512xbf16>
    %71 = vector.shape_cast %68 : vector<2x512xbf16> to vector<1x2x512xbf16>
    tpu.vector_store %arg4[%c6_42, %c0_43, %c0_44], %71 {strides = array<i32>} : memref<8x2x512xbf16, #tpu.memory_space<vmem>>, vector<1x2x512xbf16>,
    %c0_45 = arith.constant 0 : index
    %c7 = arith.constant 7 : index
    %c0_46 = arith.constant 0 : index
    %72 = vector.load %arg1[%c0_45, %c7, %c0_46] : memref<2x8x16xf32, #tpu.memory_space<vmem>>, vector<2x1x16xf32>
    %73 = vector.shape_cast %72 : vector<2x1x16xf32> to vector<2x16xf32>
    %74 = arith.truncf %73 : vector<2x16xf32> to vector<2x16xbf16>
    %cst_47 = arith.constant dense<0.000000e+00> : vector<2x512xf32>
    %75 = tpu.matmul %74, %0, %cst_47 {dimension_numbers = #tpu.dot_dimension_numbers<[1], [0], [0], [1], [0, 0, 1, 1], [], []>} : vector<2x16xbf16>, vector<16x512xbf16>, vector<2x512xf32> -> vector<2x512xf32>
    %76 = vector.broadcast %1 : vector<1x512xf32> to vector<2x512xf32>
    %77 = arith.addf %75, %76 : vector<2x512xf32>
    %78 = arith.truncf %77 : vector<2x512xf32> to vector<2x512xbf16>
    %c7_48 = arith.constant 7 : index
    %c0_49 = arith.constant 0 : index
    %c0_50 = arith.constant 0 : index
    %79 = vector.load %arg4[%c7_48, %c0_49, %c0_50] : memref<8x2x512xbf16, #tpu.memory_space<vmem>>, vector<1x2x512xbf16>
    %80 = vector.shape_cast %79 : vector<1x2x512xbf16> to vector<2x512xbf16>
    %81 = vector.shape_cast %78 : vector<2x512xbf16> to vector<1x2x512xbf16>
    tpu.vector_store %arg4[%c7_48, %c0_49, %c0_50], %81 {strides = array<i32>} : memref<8x2x512xbf16, #tpu.memory_space<vmem>>, vector<1x2x512xbf16>,
    return
  }
  func.func @transform_0(%arg0: i32) -> (i32, i32, i32) {
    %c0_i32 = arith.constant 0 : i32
    %c0_i32_0 = arith.constant 0 : i32
    %c0_i32_1 = arith.constant 0 : i32
    return %c0_i32, %arg0, %c0_i32_0 : i32, i32, i32
  }
  func.func @transform_1(%arg0: i32) -> (i32, i32) {
    %c0_i32 = arith.constant 0 : i32
    %c0_i32_0 = arith.constant 0 : i32
    %c0_i32_1 = arith.constant 0 : i32
    return %c0_i32, %c0_i32_0 : i32, i32
  }
  func.func @transform_2(%arg0: i32) -> (i32, i32) {
    %c0_i32 = arith.constant 0 : i32
    %c0_i32_0 = arith.constant 0 : i32
    %c0_i32_1 = arith.constant 0 : i32
    return %c0_i32, %c0_i32_0 : i32, i32
  }
  func.func @transform_3(%arg0: i32) -> (i32, i32, i32) {
    %c0_i32 = arith.constant 0 : i32
    %c0_i32_0 = arith.constant 0 : i32
    %c0_i32_1 = arith.constant 0 : i32
    return %arg0, %c0_i32, %c0_i32_0 : i32, i32, i32
  }
}

</mosaic_0001>

<llo_original>
// kernel: tpu_custom_call.1
$region0: #{tpu_custom_call.1}
  #allocation0 [shape = 'u32[]', space=smem, size = 0x4, offset = 0x4, fixed_abs, tag = 'smem constant byte address 0x4 - core index']
  #allocation1 [shape = 'u32[72,128]{1,0:T(1,128)}', space=vmem, size = 0x9000, scoped, tag = 'internal scratch']
  %s0 = inlined_call_operand.hbm [shape: f32[2,8,16], index: 0, kind: input, shape index: {}]
  %s1 = inlined_call_operand.hbm [shape: bf16[16,512], index: 1, kind: input, shape index: {}]
  %s2 = inlined_call_operand.hbm [shape: f32[1,512], index: 2, kind: input, shape index: {}]
  %s3 = inlined_call_operand.hbm [shape: bf16[8,2,512], index: 3, kind: output, shape index: {}]
  %s4 = sld [smem:[#allocation0]]
  $region34: #{tpu_custom_call.1} parent=0
    _
  %s6 = ssub.s32 1, %s4
  %s7 = scalar_select 0, %s6, %s4
  $region1: #{tpu_custom_call.1} parent=0
    #allocation2 [shape = 'u8[8192]{0}', space=vmem, size = 0x2000, scoped, tag = 'input window, operand 0, single buffered']
    #allocation3 [shape = 's32[1]{0}', space=sflag, size = 0x4, scoped, tag = 'scoped memory for tpu_custom_call.1']
    #allocation4 [shape = 's32[1]{0}', space=sflag, size = 0x4, scoped, tag = 'scoped memory for tpu_custom_call.1']
    #allocation5 [shape = 'u8[16384]{0}', space=vmem, size = 0x4000, scoped, tag = 'input window, operand 1, single buffered']
    #allocation6 [shape = 's32[1]{0}', space=sflag, size = 0x4, scoped, tag = 'scoped memory for tpu_custom_call.1']
    #allocation7 [shape = 'u8[2048]{0}', space=vmem, size = 0x800, scoped, tag = 'input window, operand 2, single buffered']
    #allocation8 [shape = 'u8[16384]{0}', space=vmem, size = 0x4000, scoped, tag = 'output window, operand 0, single buffered']
    %8 = vsyncpa [#allocation3], 0
    %9 = vsyncpa [#allocation6], 0
    %10 = vsyncpa [#allocation4], 0
    // Predicated region
    $region2: #{tpu_custom_call.1} parent=1 // pred_check
      _
    $region3: #{tpu_custom_call.1} parent=1 // pred_check_branch
      %12 = sbr.rel (0) target = $region5
    $region4: #{tpu_custom_call.1} parent=1 // pred_region
      %14 = vsyncadd [#allocation3], 0
      %s15 = sshll.u32 %s0, 4
      %s16 = int_to_ptr.hbm [resolvable:$true] %s15
      %s17 = sshll.u32 [#allocation2], 4
      %s18 = int_to_ptr.vmem [resolvable:$true] %s17
      %23 = dma.hbm_to_vmem [thread:$0]  %s16, 256, %s18, [#allocation3], 128, 128, 8
    $region5: #{tpu_custom_call.1} parent=1 // pred_fallthru
      _
    // Predicated region
    $region6: #{tpu_custom_call.1} parent=1 // pred_check
      _
    $region7: #{tpu_custom_call.1} parent=1 // pred_check_branch
      %25 = sbr.rel (0) target = $region9
    $region8: #{tpu_custom_call.1} parent=1 // pred_region
      %27 = vsyncadd [#allocation6], 0
      %s28 = sshll.u32 %s1, 4
      %s29 = int_to_ptr.hbm [resolvable:$true] %s28
      %s30 = sshll.u32 [#allocation5], 4
      %s31 = int_to_ptr.vmem [resolvable:$true] %s30
      %36 = dma.hbm_to_vmem [thread:$0]  %s29, 512, %s31, [#allocation6], 256, 256, 16
    $region9: #{tpu_custom_call.1} parent=1 // pred_fallthru
      _
    // Predicated region
    $region10: #{tpu_custom_call.1} parent=1 // pred_check
      _
    $region11: #{tpu_custom_call.1} parent=1 // pred_check_branch
      %38 = sbr.rel (0) target = $region13
    $region12: #{tpu_custom_call.1} parent=1 // pred_region
      %40 = vsyncadd [#allocation6], 0
      %s42 = sshll.u32 %s2, 4
      %s43 = int_to_ptr.hbm [resolvable:$true] %s42
      %s44 = sshll.u32 [#allocation7], 4
      %s45 = int_to_ptr.vmem [resolvable:$true] %s44
      %47 = dma.hbm_to_vmem [thread:$0]  %s43, 64, %s45, [#allocation6]
    $region13: #{tpu_custom_call.1} parent=1 // pred_fallthru
      _
    // Predicated region
    $region14: #{tpu_custom_call.1} parent=1 // pred_check
      _
    $region15: #{tpu_custom_call.1} parent=1 // pred_check_branch
      %49 = sbr.rel (0) target = $region17
    $region16: #{tpu_custom_call.1} parent=1 // pred_region
      %51 = dma.done [#allocation3], 256
    $region17: #{tpu_custom_call.1} parent=1 // pred_fallthru
      _
    // Predicated region
    $region18: #{tpu_custom_call.1} parent=1 // pred_check
      _
    $region19: #{tpu_custom_call.1} parent=1 // pred_check_branch
      %53 = sbr.rel (0) target = $region21
    $region20: #{tpu_custom_call.1} parent=1 // pred_region
      %55 = dma.done [#allocation6], 512
    $region21: #{tpu_custom_call.1} parent=1 // pred_fallthru
      _
    // Predicated region
    $region22: #{tpu_custom_call.1} parent=1 // pred_check
      _
    $region23: #{tpu_custom_call.1} parent=1 // pred_check_branch
      %57 = sbr.rel (0) target = $region25
    $region24: #{tpu_custom_call.1} parent=1 // pred_region
      %59 = dma.done [#allocation6], 64
    $region25: #{tpu_custom_call.1} parent=1 // pred_fallthru
      _
    %v61 = vld [vmem:[#allocation5] sm:$0xff]
    %v62 = vld [vmem:[#allocation5 + $0x8] sm:$0xff]
    %v63 = vld [vmem:[#allocation5 + $0x10] sm:$0xff]
    %v64 = vld [vmem:[#allocation5 + $0x18] sm:$0xff]
    %v65 = vld [vmem:[#allocation7] sm:$0xf]
    %v66 = vld [vmem:[#allocation2] sm:$0x1]
    %v67 = vld [vmem:[#allocation2 + $0x8] sm:$0x1]
    %v68 = vpack.c.bf16 %v66, %v66
    %v69 = vpack.c.bf16 %v67, %v67
    %v71 = vperm.slane %v65, 0
    %v72 = vperm.slane %v65, 1
    %v73 = vperm.slane %v65, 2
    %v74 = vperm.slane %v65, 3
    %v81 = vunpack.c.l.b16 %v68
    %v82 = vunpack.c.l.b16 %v69
    %v83 = vrot.slane %v82, 7
    %vm84 = vcmask 1041409
    %v85 = vsel %vm84, %v83, %v81
    %v86 = vpack.c.b16 %v85, %v85
    %v91 = vunpack.c.l.b16 %v61
    %v92 = vunpack.c.h.b16 %v61
    %v93 = vunpack.c.l.b16 %v62
    %v94 = vunpack.c.h.b16 %v62
    %v95 = vunpack.c.l.b16 %v63
    %v96 = vunpack.c.h.b16 %v63
    %v97 = vunpack.c.l.b16 %v64
    %v98 = vunpack.c.h.b16 %v64
    %v99 = vpack.c.b16 %v95, %v91
    %v100 = vpack.c.b16 %v96, %v92
    %v101 = vpack.c.b16 %v97, %v93
    %v102 = vpack.c.b16 %v98, %v94
    %vm107 = vcmask 130048
    %v109 = vsel %vm107, %v86, 0
    %111 = vmatpush.bf16.msra.mxu0 0
    %112 = vmatpush.bf16.msra.mxu0 0
    %113 = vmatpush.bf16.msra.mxu0 0
    %114 = vmatpush.bf16.msra.mxu0 0
    %115 = vmatpush.bf16.msra.mxu0 0
    %116 = vmatpush.bf16.msra.mxu0 0
    %117 = vmatpush.bf16.msra.mxu0 0
    %118 = vmatpush.bf16.msra.mxu0 %v99
    %119 = vmatmul.bf16.gmra.mxu0 %v109
    %v120 = vpop.f32.mrf.mxu0
    %v121 = vadd.f32 %v71, %v120
    %v122 = vpop.f32.mrf.mxu0
    %123 = vdwg.mxu0
    %124 = vmatpush.bf16.msra.mxu0 0
    %125 = vmatpush.bf16.msra.mxu0 0
    %126 = vmatpush.bf16.msra.mxu0 0
    %127 = vmatpush.bf16.msra.mxu0 0
    %128 = vmatpush.bf16.msra.mxu0 0
    %129 = vmatpush.bf16.msra.mxu0 0
    %130 = vmatpush.bf16.msra.mxu0 0
    %131 = vmatpush.bf16.msra.mxu0 %v100
    %132 = vmatmul.bf16.gmra.mxu0 %v109
    %v133 = vpop.f32.mrf.mxu0
    %v134 = vadd.f32 %v72, %v133
    %v135 = vpop.f32.mrf.mxu0
    %136 = vdwg.mxu0
    %137 = vmatpush.bf16.msra.mxu0 0
    %138 = vmatpush.bf16.msra.mxu0 0
    %139 = vmatpush.bf16.msra.mxu0 0
    %140 = vmatpush.bf16.msra.mxu0 0
    %141 = vmatpush.bf16.msra.mxu0 0
    %142 = vmatpush.bf16.msra.mxu0 0
    %143 = vmatpush.bf16.msra.mxu0 0
    %144 = vmatpush.bf16.msra.mxu0 %v101
    %145 = vmatmul.bf16.gmra.mxu0 %v109
    %v146 = vpop.f32.mrf.mxu0
    %v147 = vadd.f32 %v73, %v146
    %v148 = vpop.f32.mrf.mxu0
    %149 = vdwg.mxu0
    %150 = vmatpush.bf16.msra.mxu0 0
    %151 = vmatpush.bf16.msra.mxu0 0
    %152 = vmatpush.bf16.msra.mxu0 0
    %153 = vmatpush.bf16.msra.mxu0 0
    %154 = vmatpush.bf16.msra.mxu0 0
    %155 = vmatpush.bf16.msra.mxu0 0
    %156 = vmatpush.bf16.msra.mxu0 0
    %157 = vmatpush.bf16.msra.mxu0 %v102
    %158 = vmatmul.bf16.gmra.mxu0 %v109
    %v159 = vpop.f32.mrf.mxu0
    %v160 = vadd.f32 %v74, %v159
    %v161 = vpop.f32.mrf.mxu0
    %162 = vdwg.mxu0
    %v163 = vpack.c.bf16 %v134, %v121
    %v164 = vpack.c.bf16 %v160, %v147
    %v167 = vrot.slane %v163, 3
    %v168 = vrot.slane %v164, 6
    %v169 = vrot.slane %v164, 1
    %vm170 = vcmask 1040384
    %v173 = vsel %vm170, %v163, %v167
    %vm174 = vcmask 1042434
    %v177 = vsel %vm174, %v168, %v169
    %vm178 = vcmask 1041408
    %v179 = vsel %vm178, %v173, %v177
    %181 = vst [vmem:[#allocation8] sm:$0xf] %v179
    %v182 = vld [vmem:[#allocation2 + $0x1] sm:$0x1]
    %v183 = vld [vmem:[#allocation2 + $0x9] sm:$0x1]
    %v184 = vpack.c.bf16 %v182, %v182
    %v185 = vpack.c.bf16 %v183, %v183
    %v188 = vunpack.c.l.b16 %v184
    %v189 = vunpack.c.l.b16 %v185
    %v190 = vrot.slane %v189, 7
    %v191 = vsel %vm84, %v190, %v188
    %v192 = vpack.c.b16 %v191, %v191
    %v194 = vsel %vm107, %v192, 0
    %196 = vmatpush.bf16.msra.mxu0 0
    %197 = vmatpush.bf16.msra.mxu0 0
    %198 = vmatpush.bf16.msra.mxu0 0
    %199 = vmatpush.bf16.msra.mxu0 0
    %200 = vmatpush.bf16.msra.mxu0 0
    %201 = vmatpush.bf16.msra.mxu0 0
    %202 = vmatpush.bf16.msra.mxu0 0
    %203 = vmatpush.bf16.msra.mxu0 %v99
    %204 = vmatmul.bf16.gmra.mxu0 %v194
    %v205 = vpop.f32.mrf.mxu0
    %v206 = vadd.f32 %v71, %v205
    %v207 = vpop.f32.mrf.mxu0
    %208 = vdwg.mxu0
    %209 = vmatpush.bf16.msra.mxu0 0
    %210 = vmatpush.bf16.msra.mxu0 0
    %211 = vmatpush.bf16.msra.mxu0 0
    %212 = vmatpush.bf16.msra.mxu0 0
    %213 = vmatpush.bf16.msra.mxu0 0
    %214 = vmatpush.bf16.msra.mxu0 0
    %215 = vmatpush.bf16.msra.mxu0 0
    %216 = vmatpush.bf16.msra.mxu0 %v100
    %217 = vmatmul.bf16.gmra.mxu0 %v194
    %v218 = vpop.f32.mrf.mxu0
    %v219 = vadd.f32 %v72, %v218
    %v220 = vpop.f32.mrf.mxu0
    %221 = vdwg.mxu0
    %222 = vmatpush.bf16.msra.mxu0 0
    %223 = vmatpush.bf16.msra.mxu0 0
    %224 = vmatpush.bf16.msra.mxu0 0
    %225 = vmatpush.bf16.msra.mxu0 0
    %226 = vmatpush.bf16.msra.mxu0 0
    %227 = vmatpush.bf16.msra.mxu0 0
    %228 = vmatpush.bf16.msra.mxu0 0
    %229 = vmatpush.bf16.msra.mxu0 %v101
    %230 = vmatmul.bf16.gmra.mxu0 %v194
    %v231 = vpop.f32.mrf.mxu0
    %v232 = vadd.f32 %v73, %v231
    %v233 = vpop.f32.mrf.mxu0
    %234 = vdwg.mxu0
    %235 = vmatpush.bf16.msra.mxu0 0
    %236 = vmatpush.bf16.msra.mxu0 0
    %237 = vmatpush.bf16.msra.mxu0 0
    %238 = vmatpush.bf16.msra.mxu0 0
    %239 = vmatpush.bf16.msra.mxu0 0
    %240 = vmatpush.bf16.msra.mxu0 0
    %241 = vmatpush.bf16.msra.mxu0 0
    %242 = vmatpush.bf16.msra.mxu0 %v102
    %243 = vmatmul.bf16.gmra.mxu0 %v194
    %v244 = vpop.f32.mrf.mxu0
    %v245 = vadd.f32 %v74, %v244
    %v246 = vpop.f32.mrf.mxu0
    %247 = vdwg.mxu0
    %v248 = vpack.c.bf16 %v219, %v206
    %v249 = vpack.c.bf16 %v245, %v232
    %v252 = vrot.slane %v248, 3
    %v253 = vrot.slane %v249, 6
    %v254 = vrot.slane %v249, 1
    %v257 = vsel %vm170, %v248, %v252
    %v260 = vsel %vm174, %v253, %v254
    %v261 = vsel %vm178, %v257, %v260
    %s263 = scalar_lea.vmem [#allocation8], 4
    %264 = vst [vmem:[%s263] sm:$0xf] %v261
    %v265 = vld [vmem:[#allocation2 + $0x2] sm:$0x1]
    %v266 = vld [vmem:[#allocation2 + $0xa] sm:$0x1]
    %v267 = vpack.c.bf16 %v265, %v265
    %v268 = vpack.c.bf16 %v266, %v266
    %v271 = vunpack.c.l.b16 %v267
    %v272 = vunpack.c.l.b16 %v268
    %v273 = vrot.slane %v272, 7
    %v274 = vsel %vm84, %v273, %v271
    %v275 = vpack.c.b16 %v274, %v274
    %v277 = vsel %vm107, %v275, 0
    %279 = vmatpush.bf16.msra.mxu0 0
    %280 = vmatpush.bf16.msra.mxu0 0
    %281 = vmatpush.bf16.msra.mxu0 0
    %282 = vmatpush.bf16.msra.mxu0 0
    %283 = vmatpush.bf16.msra.mxu0 0
    %284 = vmatpush.bf16.msra.mxu0 0
    %285 = vmatpush.bf16.msra.mxu0 0
    %286 = vmatpush.bf16.msra.mxu0 %v99
    %287 = vmatmul.bf16.gmra.mxu0 %v277
    %v288 = vpop.f32.mrf.mxu0
    %v289 = vadd.f32 %v71, %v288
    %v290 = vpop.f32.mrf.mxu0
    %291 = vdwg.mxu0
    %292 = vmatpush.bf16.msra.mxu0 0
    %293 = vmatpush.bf16.msra.mxu0 0
    %294 = vmatpush.bf16.msra.mxu0 0
    %295 = vmatpush.bf16.msra.mxu0 0
    %296 = vmatpush.bf16.msra.mxu0 0
    %297 = vmatpush.bf16.msra.mxu0 0
    %298 = vmatpush.bf16.msra.mxu0 0
    %299 = vmatpush.bf16.msra.mxu0 %v100
    %300 = vmatmul.bf16.gmra.mxu0 %v277
    %v301 = vpop.f32.mrf.mxu0
    %v302 = vadd.f32 %v72, %v301
    %v303 = vpop.f32.mrf.mxu0
    %304 = vdwg.mxu0
    %305 = vmatpush.bf16.msra.mxu0 0
    %306 = vmatpush.bf16.msra.mxu0 0
    %307 = vmatpush.bf16.msra.mxu0 0
    %308 = vmatpush.bf16.msra.mxu0 0
    %309 = vmatpush.bf16.msra.mxu0 0
    %310 = vmatpush.bf16.msra.mxu0 0
    %311 = vmatpush.bf16.msra.mxu0 0
    %312 = vmatpush.bf16.msra.mxu0 %v101
    %313 = vmatmul.bf16.gmra.mxu0 %v277
    %v314 = vpop.f32.mrf.mxu0
    %v315 = vadd.f32 %v73, %v314
    %v316 = vpop.f32.mrf.mxu0
    %317 = vdwg.mxu0
    %318 = vmatpush.bf16.msra.mxu0 0
    %319 = vmatpush.bf16.msra.mxu0 0
    %320 = vmatpush.bf16.msra.mxu0 0
    %321 = vmatpush.bf16.msra.mxu0 0
    %322 = vmatpush.bf16.msra.mxu0 0
    %323 = vmatpush.bf16.msra.mxu0 0
    %324 = vmatpush.bf16.msra.mxu0 0
    %325 = vmatpush.bf16.msra.mxu0 %v102
    %326 = vmatmul.bf16.gmra.mxu0 %v277
    %v327 = vpop.f32.mrf.mxu0
    %v328 = vadd.f32 %v74, %v327
    %v329 = vpop.f32.mrf.mxu0
    %330 = vdwg.mxu0
    %v331 = vpack.c.bf16 %v302, %v289
    %v332 = vpack.c.bf16 %v328, %v315
    %v335 = vrot.slane %v331, 3
    %v336 = vrot.slane %v332, 6
    %v337 = vrot.slane %v332, 1
    %v340 = vsel %vm170, %v331, %v335
    %v343 = vsel %vm174, %v336, %v337
    %v344 = vsel %vm178, %v340, %v343
    %s346 = scalar_lea.vmem [#allocation8], 8
    %347 = vst [vmem:[%s346] sm:$0xf] %v344
    %v348 = vld [vmem:[#allocation2 + $0x3] sm:$0x1]
    %v349 = vld [vmem:[#allocation2 + $0xb] sm:$0x1]
    %v350 = vpack.c.bf16 %v348, %v348
    %v351 = vpack.c.bf16 %v349, %v349
    %v354 = vunpack.c.l.b16 %v350
    %v355 = vunpack.c.l.b16 %v351
    %v356 = vrot.slane %v355, 7
    %v357 = vsel %vm84, %v356, %v354
    %v358 = vpack.c.b16 %v357, %v357
    %v360 = vsel %vm107, %v358, 0
    %362 = vmatpush.bf16.msra.mxu0 0
    %363 = vmatpush.bf16.msra.mxu0 0
    %364 = vmatpush.bf16.msra.mxu0 0
    %365 = vmatpush.bf16.msra.mxu0 0
    %366 = vmatpush.bf16.msra.mxu0 0
    %367 = vmatpush.bf16.msra.mxu0 0
    %368 = vmatpush.bf16.msra.mxu0 0
    %369 = vmatpush.bf16.msra.mxu0 %v99
    %370 = vmatmul.bf16.gmra.mxu0 %v360
    %v371 = vpop.f32.mrf.mxu0
    %v372 = vadd.f32 %v71, %v371
    %v373 = vpop.f32.mrf.mxu0
    %374 = vdwg.mxu0
    %375 = vmatpush.bf16.msra.mxu0 0
    %376 = vmatpush.bf16.msra.mxu0 0
    %377 = vmatpush.bf16.msra.mxu0 0
    %378 = vmatpush.bf16.msra.mxu0 0
    %379 = vmatpush.bf16.msra.mxu0 0
    %380 = vmatpush.bf16.msra.mxu0 0
    %381 = vmatpush.bf16.msra.mxu0 0
    %382 = vmatpush.bf16.msra.mxu0 %v100
    %383 = vmatmul.bf16.gmra.mxu0 %v360
    %v384 = vpop.f32.mrf.mxu0
    %v385 = vadd.f32 %v72, %v384
    %v386 = vpop.f32.mrf.mxu0
    %387 = vdwg.mxu0
    %388 = vmatpush.bf16.msra.mxu0 0
    %389 = vmatpush.bf16.msra.mxu0 0
    %390 = vmatpush.bf16.msra.mxu0 0
    %391 = vmatpush.bf16.msra.mxu0 0
    %392 = vmatpush.bf16.msra.mxu0 0
    %393 = vmatpush.bf16.msra.mxu0 0
    %394 = vmatpush.bf16.msra.mxu0 0
    %395 = vmatpush.bf16.msra.mxu0 %v101
    %396 = vmatmul.bf16.gmra.mxu0 %v360
    %v397 = vpop.f32.mrf.mxu0
    %v398 = vadd.f32 %v73, %v397
    %v399 = vpop.f32.mrf.mxu0
    %400 = vdwg.mxu0
    %401 = vmatpush.bf16.msra.mxu0 0
    %402 = vmatpush.bf16.msra.mxu0 0
    %403 = vmatpush.bf16.msra.mxu0 0
    %404 = vmatpush.bf16.msra.mxu0 0
    %405 = vmatpush.bf16.msra.mxu0 0
    %406 = vmatpush.bf16.msra.mxu0 0
    %407 = vmatpush.bf16.msra.mxu0 0
    %408 = vmatpush.bf16.msra.mxu0 %v102
    %409 = vmatmul.bf16.gmra.mxu0 %v360
    %v410 = vpop.f32.mrf.mxu0
    %v411 = vadd.f32 %v74, %v410
    %v412 = vpop.f32.mrf.mxu0
    %413 = vdwg.mxu0
    %v414 = vpack.c.bf16 %v385, %v372
    %v415 = vpack.c.bf16 %v411, %v398
    %v418 = vrot.slane %v414, 3
    %v419 = vrot.slane %v415, 6
    %v420 = vrot.slane %v415, 1
    %v423 = vsel %vm170, %v414, %v418
    %v426 = vsel %vm174, %v419, %v420
    %v427 = vsel %vm178, %v423, %v426
    %s429 = scalar_lea.vmem [#allocation8], 12
    %430 = vst [vmem:[%s429] sm:$0xf] %v427
    %v431 = vld [vmem:[#allocation2 + $0x4] sm:$0x1]
    %v432 = vld [vmem:[#allocation2 + $0xc] sm:$0x1]
    %v433 = vpack.c.bf16 %v431, %v431
    %v434 = vpack.c.bf16 %v432, %v432
    %v437 = vunpack.c.l.b16 %v433
    %v438 = vunpack.c.l.b16 %v434
    %v439 = vrot.slane %v438, 7
    %v440 = vsel %vm84, %v439, %v437
    %v441 = vpack.c.b16 %v440, %v440
    %v443 = vsel %vm107, %v441, 0
    %445 = vmatpush.bf16.msra.mxu0 0
    %446 = vmatpush.bf16.msra.mxu0 0
    %447 = vmatpush.bf16.msra.mxu0 0
    %448 = vmatpush.bf16.msra.mxu0 0
    %449 = vmatpush.bf16.msra.mxu0 0
    %450 = vmatpush.bf16.msra.mxu0 0
    %451 = vmatpush.bf16.msra.mxu0 0
    %452 = vmatpush.bf16.msra.mxu0 %v99
    %453 = vmatmul.bf16.gmra.mxu0 %v443
    %v454 = vpop.f32.mrf.mxu0
    %v455 = vadd.f32 %v71, %v454
    %v456 = vpop.f32.mrf.mxu0
    %457 = vdwg.mxu0
    %458 = vmatpush.bf16.msra.mxu0 0
    %459 = vmatpush.bf16.msra.mxu0 0
    %460 = vmatpush.bf16.msra.mxu0 0
    %461 = vmatpush.bf16.msra.mxu0 0
    %462 = vmatpush.bf16.msra.mxu0 0
    %463 = vmatpush.bf16.msra.mxu0 0
    %464 = vmatpush.bf16.msra.mxu0 0
    %465 = vmatpush.bf16.msra.mxu0 %v100
    %466 = vmatmul.bf16.gmra.mxu0 %v443
    %v467 = vpop.f32.mrf.mxu0
    %v468 = vadd.f32 %v72, %v467
    %v469 = vpop.f32.mrf.mxu0
    %470 = vdwg.mxu0
    %471 = vmatpush.bf16.msra.mxu0 0
    %472 = vmatpush.bf16.msra.mxu0 0
    %473 = vmatpush.bf16.msra.mxu0 0
    %474 = vmatpush.bf16.msra.mxu0 0
    %475 = vmatpush.bf16.msra.mxu0 0
    %476 = vmatpush.bf16.msra.mxu0 0
    %477 = vmatpush.bf16.msra.mxu0 0
    %478 = vmatpush.bf16.msra.mxu0 %v101
    %479 = vmatmul.bf16.gmra.mxu0 %v443
    %v480 = vpop.f32.mrf.mxu0
    %v481 = vadd.f32 %v73, %v480
    %v482 = vpop.f32.mrf.mxu0
    %483 = vdwg.mxu0
    %484 = vmatpush.bf16.msra.mxu0 0
    %485 = vmatpush.bf16.msra.mxu0 0
    %486 = vmatpush.bf16.msra.mxu0 0
    %487 = vmatpush.bf16.msra.mxu0 0
    %488 = vmatpush.bf16.msra.mxu0 0
    %489 = vmatpush.bf16.msra.mxu0 0
    %490 = vmatpush.bf16.msra.mxu0 0
    %491 = vmatpush.bf16.msra.mxu0 %v102
    %492 = vmatmul.bf16.gmra.mxu0 %v443
    %v493 = vpop.f32.mrf.mxu0
    %v494 = vadd.f32 %v74, %v493
    %v495 = vpop.f32.mrf.mxu0
    %496 = vdwg.mxu0
    %v497 = vpack.c.bf16 %v468, %v455
    %v498 = vpack.c.bf16 %v494, %v481
    %v501 = vrot.slane %v497, 3
    %v502 = vrot.slane %v498, 6
    %v503 = vrot.slane %v498, 1
    %v506 = vsel %vm170, %v497, %v501
    %v509 = vsel %vm174, %v502, %v503
    %v510 = vsel %vm178, %v506, %v509
    %s512 = scalar_lea.vmem [#allocation8], 16
    %513 = vst [vmem:[%s512] sm:$0xf] %v510
    %v514 = vld [vmem:[#allocation2 + $0x5] sm:$0x1]
    %v515 = vld [vmem:[#allocation2 + $0xd] sm:$0x1]
    %v516 = vpack.c.bf16 %v514, %v514
    %v517 = vpack.c.bf16 %v515, %v515
    %v520 = vunpack.c.l.b16 %v516
    %v521 = vunpack.c.l.b16 %v517
    %v522 = vrot.slane %v521, 7
    %v523 = vsel %vm84, %v522, %v520
    %v524 = vpack.c.b16 %v523, %v523
    %v526 = vsel %vm107, %v524, 0
    %528 = vmatpush.bf16.msra.mxu0 0
    %529 = vmatpush.bf16.msra.mxu0 0
    %530 = vmatpush.bf16.msra.mxu0 0
    %531 = vmatpush.bf16.msra.mxu0 0
    %532 = vmatpush.bf16.msra.mxu0 0
    %533 = vmatpush.bf16.msra.mxu0 0
    %534 = vmatpush.bf16.msra.mxu0 0
    %535 = vmatpush.bf16.msra.mxu0 %v99
    %536 = vmatmul.bf16.gmra.mxu0 %v526
    %v537 = vpop.f32.mrf.mxu0
    %v538 = vadd.f32 %v71, %v537
    %v539 = vpop.f32.mrf.mxu0
    %540 = vdwg.mxu0
    %541 = vmatpush.bf16.msra.mxu0 0
    %542 = vmatpush.bf16.msra.mxu0 0
    %543 = vmatpush.bf16.msra.mxu0 0
    %544 = vmatpush.bf16.msra.mxu0 0
    %545 = vmatpush.bf16.msra.mxu0 0
    %546 = vmatpush.bf16.msra.mxu0 0
    %547 = vmatpush.bf16.msra.mxu0 0
    %548 = vmatpush.bf16.msra.mxu0 %v100
    %549 = vmatmul.bf16.gmra.mxu0 %v526
    %v550 = vpop.f32.mrf.mxu0
    %v551 = vadd.f32 %v72, %v550
    %v552 = vpop.f32.mrf.mxu0
    %553 = vdwg.mxu0
    %554 = vmatpush.bf16.msra.mxu0 0
    %555 = vmatpush.bf16.msra.mxu0 0
    %556 = vmatpush.bf16.msra.mxu0 0
    %557 = vmatpush.bf16.msra.mxu0 0
    %558 = vmatpush.bf16.msra.mxu0 0
    %559 = vmatpush.bf16.msra.mxu0 0
    %560 = vmatpush.bf16.msra.mxu0 0
    %561 = vmatpush.bf16.msra.mxu0 %v101
    %562 = vmatmul.bf16.gmra.mxu0 %v526
    %v563 = vpop.f32.mrf.mxu0
    %v564 = vadd.f32 %v73, %v563
    %v565 = vpop.f32.mrf.mxu0
    %566 = vdwg.mxu0
    %567 = vmatpush.bf16.msra.mxu0 0
    %568 = vmatpush.bf16.msra.mxu0 0
    %569 = vmatpush.bf16.msra.mxu0 0
    %570 = vmatpush.bf16.msra.mxu0 0
    %571 = vmatpush.bf16.msra.mxu0 0
    %572 = vmatpush.bf16.msra.mxu0 0
    %573 = vmatpush.bf16.msra.mxu0 0
    %574 = vmatpush.bf16.msra.mxu0 %v102
    %575 = vmatmul.bf16.gmra.mxu0 %v526
    %v576 = vpop.f32.mrf.mxu0
    %v577 = vadd.f32 %v74, %v576
    %v578 = vpop.f32.mrf.mxu0
    %579 = vdwg.mxu0
    %v580 = vpack.c.bf16 %v551, %v538
    %v581 = vpack.c.bf16 %v577, %v564
    %v584 = vrot.slane %v580, 3
    %v585 = vrot.slane %v581, 6
    %v586 = vrot.slane %v581, 1
    %v589 = vsel %vm170, %v580, %v584
    %v592 = vsel %vm174, %v585, %v586
    %v593 = vsel %vm178, %v589, %v592
    %s595 = scalar_lea.vmem [#allocation8], 20
    %596 = vst [vmem:[%s595] sm:$0xf] %v593
    %v597 = vld [vmem:[#allocation2 + $0x6] sm:$0x1]
    %v598 = vld [vmem:[#allocation2 + $0xe] sm:$0x1]
    %v599 = vpack.c.bf16 %v597, %v597
    %v600 = vpack.c.bf16 %v598, %v598
    %v603 = vunpack.c.l.b16 %v599
    %v604 = vunpack.c.l.b16 %v600
    %v605 = vrot.slane %v604, 7
    %v606 = vsel %vm84, %v605, %v603
    %v607 = vpack.c.b16 %v606, %v606
    %v609 = vsel %vm107, %v607, 0
    %611 = vmatpush.bf16.msra.mxu0 0
    %612 = vmatpush.bf16.msra.mxu0 0
    %613 = vmatpush.bf16.msra.mxu0 0
    %614 = vmatpush.bf16.msra.mxu0 0
    %615 = vmatpush.bf16.msra.mxu0 0
    %616 = vmatpush.bf16.msra.mxu0 0
    %617 = vmatpush.bf16.msra.mxu0 0
    %618 = vmatpush.bf16.msra.mxu0 %v99
    %619 = vmatmul.bf16.gmra.mxu0 %v609
    %v620 = vpop.f32.mrf.mxu0
    %v621 = vadd.f32 %v71, %v620
    %v622 = vpop.f32.mrf.mxu0
    %623 = vdwg.mxu0
    %624 = vmatpush.bf16.msra.mxu0 0
    %625 = vmatpush.bf16.msra.mxu0 0
    %626 = vmatpush.bf16.msra.mxu0 0
    %627 = vmatpush.bf16.msra.mxu0 0
    %628 = vmatpush.bf16.msra.mxu0 0
    %629 = vmatpush.bf16.msra.mxu0 0
    %630 = vmatpush.bf16.msra.mxu0 0
    %631 = vmatpush.bf16.msra.mxu0 %v100
    %632 = vmatmul.bf16.gmra.mxu0 %v609
    %v633 = vpop.f32.mrf.mxu0
    %v634 = vadd.f32 %v72, %v633
    %v635 = vpop.f32.mrf.mxu0
    %636 = vdwg.mxu0
    %637 = vmatpush.bf16.msra.mxu0 0
    %638 = vmatpush.bf16.msra.mxu0 0
    %639 = vmatpush.bf16.msra.mxu0 0
    %640 = vmatpush.bf16.msra.mxu0 0
    %641 = vmatpush.bf16.msra.mxu0 0
    %642 = vmatpush.bf16.msra.mxu0 0
    %643 = vmatpush.bf16.msra.mxu0 0
    %644 = vmatpush.bf16.msra.mxu0 %v101
    %645 = vmatmul.bf16.gmra.mxu0 %v609
    %v646 = vpop.f32.mrf.mxu0
    %v647 = vadd.f32 %v73, %v646
    %v648 = vpop.f32.mrf.mxu0
    %649 = vdwg.mxu0
    %650 = vmatpush.bf16.msra.mxu0 0
    %651 = vmatpush.bf16.msra.mxu0 0
    %652 = vmatpush.bf16.msra.mxu0 0
    %653 = vmatpush.bf16.msra.mxu0 0
    %654 = vmatpush.bf16.msra.mxu0 0
    %655 = vmatpush.bf16.msra.mxu0 0
    %656 = vmatpush.bf16.msra.mxu0 0
    %657 = vmatpush.bf16.msra.mxu0 %v102
    %658 = vmatmul.bf16.gmra.mxu0 %v609
    %v659 = vpop.f32.mrf.mxu0
    %v660 = vadd.f32 %v74, %v659
    %v661 = vpop.f32.mrf.mxu0
    %662 = vdwg.mxu0
    %v663 = vpack.c.bf16 %v634, %v621
    %v664 = vpack.c.bf16 %v660, %v647
    %v667 = vrot.slane %v663, 3
    %v668 = vrot.slane %v664, 6
    %v669 = vrot.slane %v664, 1
    %v672 = vsel %vm170, %v663, %v667
    %v675 = vsel %vm174, %v668, %v669
    %v676 = vsel %vm178, %v672, %v675
    %s678 = scalar_lea.vmem [#allocation8], 24
    %679 = vst [vmem:[%s678] sm:$0xf] %v676
    %v680 = vld [vmem:[#allocation2 + $0x7] sm:$0x1]
    %v681 = vld [vmem:[#allocation2 + $0xf] sm:$0x1]
    %v682 = vpack.c.bf16 %v680, %v680
    %v683 = vpack.c.bf16 %v681, %v681
    %v686 = vunpack.c.l.b16 %v682
    %v687 = vunpack.c.l.b16 %v683
    %v688 = vrot.slane %v687, 7
    %v689 = vsel %vm84, %v688, %v686
    %v690 = vpack.c.b16 %v689, %v689
    %v692 = vsel %vm107, %v690, 0
    %694 = vmatpush.bf16.msra.mxu0 0
    %695 = vmatpush.bf16.msra.mxu0 0
    %696 = vmatpush.bf16.msra.mxu0 0
    %697 = vmatpush.bf16.msra.mxu0 0
    %698 = vmatpush.bf16.msra.mxu0 0
    %699 = vmatpush.bf16.msra.mxu0 0
    %700 = vmatpush.bf16.msra.mxu0 0
    %701 = vmatpush.bf16.msra.mxu0 %v99
    %702 = vmatmul.bf16.gmra.mxu0 %v692
    %v703 = vpop.f32.mrf.mxu0
    %v704 = vadd.f32 %v71, %v703
    %v705 = vpop.f32.mrf.mxu0
    %706 = vdwg.mxu0
    %707 = vmatpush.bf16.msra.mxu0 0
    %708 = vmatpush.bf16.msra.mxu0 0
    %709 = vmatpush.bf16.msra.mxu0 0
    %710 = vmatpush.bf16.msra.mxu0 0
    %711 = vmatpush.bf16.msra.mxu0 0
    %712 = vmatpush.bf16.msra.mxu0 0
    %713 = vmatpush.bf16.msra.mxu0 0
    %714 = vmatpush.bf16.msra.mxu0 %v100
    %715 = vmatmul.bf16.gmra.mxu0 %v692
    %v716 = vpop.f32.mrf.mxu0
    %v717 = vadd.f32 %v72, %v716
    %v718 = vpop.f32.mrf.mxu0
    %719 = vdwg.mxu0
    %720 = vmatpush.bf16.msra.mxu0 0
    %721 = vmatpush.bf16.msra.mxu0 0
    %722 = vmatpush.bf16.msra.mxu0 0
    %723 = vmatpush.bf16.msra.mxu0 0
    %724 = vmatpush.bf16.msra.mxu0 0
    %725 = vmatpush.bf16.msra.mxu0 0
    %726 = vmatpush.bf16.msra.mxu0 0
    %727 = vmatpush.bf16.msra.mxu0 %v101
    %728 = vmatmul.bf16.gmra.mxu0 %v692
    %v729 = vpop.f32.mrf.mxu0
    %v730 = vadd.f32 %v73, %v729
    %v731 = vpop.f32.mrf.mxu0
    %732 = vdwg.mxu0
    %733 = vmatpush.bf16.msra.mxu0 0
    %734 = vmatpush.bf16.msra.mxu0 0
    %735 = vmatpush.bf16.msra.mxu0 0
    %736 = vmatpush.bf16.msra.mxu0 0
    %737 = vmatpush.bf16.msra.mxu0 0
    %738 = vmatpush.bf16.msra.mxu0 0
    %739 = vmatpush.bf16.msra.mxu0 0
    %740 = vmatpush.bf16.msra.mxu0 %v102
    %741 = vmatmul.bf16.gmra.mxu0 %v692
    %v742 = vpop.f32.mrf.mxu0
    %v743 = vadd.f32 %v74, %v742
    %v744 = vpop.f32.mrf.mxu0
    %745 = vdwg.mxu0
    %v746 = vpack.c.bf16 %v717, %v704
    %v747 = vpack.c.bf16 %v743, %v730
    %v750 = vrot.slane %v746, 3
    %v751 = vrot.slane %v747, 6
    %v752 = vrot.slane %v747, 1
    %v755 = vsel %vm170, %v746, %v750
    %v758 = vsel %vm174, %v751, %v752
    %v759 = vsel %vm178, %v755, %v758
    %s761 = scalar_lea.vmem [#allocation8], 28
    %762 = vst [vmem:[%s761] sm:$0xf] %v759
    // Predicated region
    $region26: #{tpu_custom_call.1} parent=1 // pred_check
      _
    $region27: #{tpu_custom_call.1} parent=1 // pred_check_branch
      %764 = sbr.rel (0) target = $region29
    $region28: #{tpu_custom_call.1} parent=1 // pred_region
      %766 = vsyncadd [#allocation4], 0
      %s767 = sshll.u32 [#allocation8], 4
      %s768 = int_to_ptr.vmem [resolvable:$true] %s767
      %s769 = sshll.u32 %s3, 4
      %s770 = int_to_ptr.hbm [resolvable:$true] %s769
      %775 = dma.vmem_to_hbm [thread:$0]  %s768, 512, %s770, [#allocation4], 64, 64, 4
    $region29: #{tpu_custom_call.1} parent=1 // pred_fallthru
      _
    // Predicated region
    $region30: #{tpu_custom_call.1} parent=1 // pred_check
      _
    $region31: #{tpu_custom_call.1} parent=1 // pred_check_branch
      %777 = sbr.rel (0) target = $region33
    $region32: #{tpu_custom_call.1} parent=1 // pred_region
      %779 = dma.done [#allocation4], 512
    $region33: #{tpu_custom_call.1} parent=1 // pred_fallthru
      _
    %780 = vsyncpa [#allocation3], 1
    %781 = vsyncpa [#allocation6], 1
    %782 = vsyncpa [#allocation4], 1

</llo_original>
